<compile_context>
chip_gen: v7x
topology: tpu7x:2x2x1
jax: 0.10.0
libtpu: 0.0.40
codegen_flags: <defaults>
</compile_context>

<pallas_src>
import functools

import jax
import jax.numpy as jnp
from jax.experimental import pallas as pl
from jax.experimental.pallas import tpu as pltpu


def visual_conv1d_kernel(x_ref, w1_ref, rs1_ref, bias1_ref, g1_ref, b1_ref,
                         wd_ref, alpha_ref, w2_ref, rs2_ref, bias2_ref, o_ref,
                         *, l_true, compute_dtype):
    eps = 1e-8
    cdt = compute_dtype
    V = x_ref.shape[1]
    H = g1_ref.shape[0]
    lp = x_ref.shape[2]
    padded = l_true < lp                                 # trace-time constant

    # ---- relu_0 + gLN_0 statistics (apply is folded into conv1x1) ----
    y = jnp.maximum(x_ref[0], 0.0)                       # [V, Lp]; pad lanes stay 0
    inv_n0 = 1.0 / (V * l_true)
    mean0 = jnp.sum(y) * inv_n0
    var0 = jnp.maximum(jnp.sum(y * y) * inv_n0 - mean0 * mean0, 0.0)
    rstd0 = jax.lax.rsqrt(var0 + eps)

    # ---- conv1x1 (V -> H) with gLN_0 apply folded in; fused ReLU ----
    mm1 = jnp.dot(w1_ref[...], y.astype(jnp.bfloat16),
                  preferred_element_type=jnp.float32)    # [H, Lp] f32
    col1 = (-mean0 * rstd0) * rs1_ref[...] + bias1_ref[...]     # [H, 1]
    h = jnp.maximum(mm1 * rstd0 + col1, 0.0)

    # ---- gLN_1 ----
    if padded:
        lane = jax.lax.broadcasted_iota(jnp.int32, (1, lp), 1)
        valid = lane < l_true
        h = jnp.where(valid, h, 0.0)                     # exclude pad from stats
    inv_n1 = 1.0 / (H * l_true)
    mean1 = jnp.sum(h) * inv_n1
    var1 = jnp.maximum(jnp.sum(h * h) * inv_n1 - mean1 * mean1, 0.0)
    rstd1 = jax.lax.rsqrt(var1 + eps)
    s1 = g1_ref[...] * rstd1                             # [H, 1] f32
    scale1 = s1.astype(cdt)
    shift1 = (b1_ref[...] - mean1 * s1).astype(cdt)
    hc = h.astype(cdt) * scale1 + shift1                 # elementwise chain in cdt
    if padded:
        hc = jnp.where(valid, hc, 0.0)                   # zero halos for dsconv

    # ---- depthwise conv k=3, pad=1 (XLU rolls) ----
    left = pltpu.roll(hc, shift=1, axis=1)               # lane l <- hc[l-1]
    right = pltpu.roll(hc, shift=lp - 1, axis=1)         # lane l <- hc[l+1]
    if not padded:
        # No zero pad lanes to act as halos: mask the wrapped-around taps.
        lane = jax.lax.broadcasted_iota(jnp.int32, (1, lp), 1)
        left = jnp.where(lane == 0, 0.0, left)
        right = jnp.where(lane == l_true - 1, 0.0, right)
    wd = wd_ref[...].astype(cdt)                         # [H, 3]
    hd = wd[:, 0:1] * left + wd[:, 1:2] * hc + wd[:, 2:3] * right

    # ---- PReLU (scalar alpha from SMEM) ----
    a = alpha_ref[0].astype(cdt)
    hd = jnp.where(hd > 0, hd, a * hd)
    if padded:
        hd = jnp.where(valid, hd, 0.0)                   # pad lanes -> 0 for stats/MXU

    # ---- gLN_2 statistics in f32 (apply folded into pw_conv) ----
    h32 = hd.astype(jnp.float32)
    mean2 = jnp.sum(h32) * inv_n1
    var2 = jnp.maximum(jnp.sum(h32 * h32) * inv_n1 - mean2 * mean2, 0.0)
    rstd2 = jax.lax.rsqrt(var2 + eps)

    # ---- pw_conv (H -> V) with gLN_2 apply folded in + residual ----
    mm2 = jnp.dot(w2_ref[...], hd.astype(jnp.bfloat16),
                  preferred_element_type=jnp.float32)    # [V, Lp] f32
    col2 = (-mean2 * rstd2) * rs2_ref[...] + bias2_ref[...]     # [V, 1]
    # NOTE: when padded, the pad columns of the output hold the per-channel
    # constant col2 (+0 residual); they are sliced off in the wrapper.
    o_ref[0] = mm2 * rstd2 + (col2 + x_ref[0])


def visual_conv1d(x, params, *, lane_align=256, elementwise_bf16=None):
    """x: [B, V, L] float32.  params: dict of weights (see init_params)."""
    B, V, L = x.shape
    H = params["w1"].shape[0]
    Lp = ((L + lane_align - 1) // lane_align) * lane_align
    padded = Lp != L
    x_p = jnp.pad(x, ((0, 0), (0, 0), (0, Lp - L))) if padded else x

    # bf16 elementwise chain only where the VPU/EUP have bf16 (v6e / v7x);
    # stats + rstd stay f32 everywhere.
    if elementwise_bf16 is None:
        kind = jax.devices()[0].device_kind.lower()
        elementwise_bf16 = any(t in kind for t in ("v6", "v7", "7x"))
    cdt = jnp.bfloat16 if elementwise_bf16 else jnp.float32

    # Host-side folding: gamma_0 -> w1 columns, gamma_2 -> w2 columns.  The
    # betas become per-output-channel biases, and the per-step mean/rstd terms
    # only need the row-sums of the folded weights.
    w1g = params["w1"] * params["g0"][:, 0][None, :]
    w2g = params["w2"] * params["g2"][:, 0][None, :]
    w1f = w1g.astype(jnp.bfloat16)
    w2f = w2g.astype(jnp.bfloat16)
    rs1 = jnp.sum(w1g, axis=1, keepdims=True).astype(jnp.float32)   # [H, 1]
    rs2 = jnp.sum(w2g, axis=1, keepdims=True).astype(jnp.float32)   # [V, 1]
    bias1 = (params["w1"] @ params["b0"]).astype(jnp.float32)       # [H, 1]
    bias2 = (params["w2"] @ params["b2"]).astype(jnp.float32)       # [V, 1]
    alpha = params["alpha"].reshape((1,)).astype(jnp.float32)

    # Grid-invariant operands: single-buffered to save VMEM.
    const = lambda shape: pl.BlockSpec(shape, lambda b: (0,) * len(shape),
                                       pipeline_mode=pl.Buffered(1))

    # Per-step VMEM footprint (double-buffered x/out blocks, bf16 weight
    # copies, a handful of [H, Lp] temporaries), 2x headroom, <=48 MiB so
    # compiler scratch still fits on v7x's 64 MiB physical VMEM.
    act = V * Lp * 4
    hid = H * Lp * 4
    est = 6 * act + 6 * hid + 4 * H * V * 2 + (10 * H + 4 * V) * 4
    vmem_limit = int(min(max(2 * est, 16 << 20), 48 << 20))

    out = pl.pallas_call(
        functools.partial(visual_conv1d_kernel, l_true=L, compute_dtype=cdt),
        out_shape=jax.ShapeDtypeStruct((B, V, Lp), jnp.float32),
        grid_spec=pltpu.PrefetchScalarGridSpec(
            num_scalar_prefetch=0,
            grid=(B,),
            in_specs=[
                pl.BlockSpec((1, V, Lp), lambda b: (b, 0, 0)),      # x
                const((H, V)),    # w1 (gamma0 folded, bf16)
                const((H, 1)),    # rowsum(w1 * gamma0)
                const((H, 1)),    # bias1 = w1 @ beta0
                const((H, 1)),    # gamma_1
                const((H, 1)),    # beta_1
                const((H, 3)),    # depthwise weight
                pl.BlockSpec(memory_space=pltpu.MemorySpace.SMEM),  # prelu alpha
                const((V, H)),    # w2 (gamma2 folded, bf16)
                const((V, 1)),    # rowsum(w2 * gamma2)
                const((V, 1)),    # bias2 = w2 @ beta2
            ],
            out_specs=pl.BlockSpec((1, V, Lp), lambda b: (b, 0, 0)),
        ),
        compiler_params=pltpu.CompilerParams(
            dimension_semantics=("parallel",),
            vmem_limit_bytes=vmem_limit),
    )(x_p, w1f, rs1, bias1, params["g1"], params["b1"], params["wd"], alpha,
      w2f, rs2, bias2)
    return out[:, :, :L] if padded else out


def init_params(key, V, H):
    ks = jax.random.split(key, 9)
    n = lambda k, s, sc: jax.random.normal(k, s, jnp.float32) * sc
    return {
        # GlobalLayerNorm params (gamma=1, beta=0 at reset; perturbed here so
        # the host-side gamma/beta folding path is actually exercised).
        "g0": 1.0 + n(ks[0], (V, 1), 0.1),
        "b0": n(ks[1], (V, 1), 0.1),
        "g1": 1.0 + n(ks[2], (H, 1), 0.1),
        "b1": n(ks[3], (H, 1), 0.1),
        "g2": 1.0 + n(ks[4], (H, 1), 0.1),
        "b2": n(ks[5], (H, 1), 0.1),
        # conv1x1: Conv1d(V, H, 1, bias=False) -> weight [H, V, 1] -> [H, V]
        "w1": n(ks[6], (H, V), 0.05),
        # dsconv: Conv1d(H, H, 3, groups=H, bias=False) -> [H, 1, 3] -> [H, 3]
        "wd": n(ks[7], (H, 3), 0.2),
        # PReLU default init
        "alpha": jnp.full((1, 1), 0.25, jnp.float32),
        # pw_conv: Conv1d(H, V, 1, bias=False) -> [V, H, 1] -> [V, H]
        "w2": n(ks[8], (V, H), 0.05),
    }


def _reference(x, p):
    """Pure-JAX f32 reference mirroring the PyTorch module semantics."""
    def gln(y, g, b):
        mean = jnp.mean(y, axis=(1, 2), keepdims=True)
        var = jnp.mean((y - mean) ** 2, axis=(1, 2), keepdims=True)
        return g[None] * (y - mean) / jnp.sqrt(var + 1e-8) + b[None]

    y = jnp.maximum(x, 0.0)
    y = gln(y, p["g0"], p["b0"])
    h = jnp.einsum("hv,bvl->bhl", p["w1"], y)
    h = jnp.maximum(h, 0.0)
    h = gln(h, p["g1"], p["b1"])
    hp = jnp.pad(h, ((0, 0), (0, 0), (1, 1)))
    h = (p["wd"][None, :, 0:1] * hp[:, :, :-2]
         + p["wd"][None, :, 1:2] * hp[:, :, 1:-1]
         + p["wd"][None, :, 2:3] * hp[:, :, 2:])
    a = p["alpha"][0, 0]
    h = jnp.where(h > 0.0, h, a * h)
    h = gln(h, p["g2"], p["b2"])
    out = jnp.einsum("vh,bhl->bvl", p["w2"], h)
    return out + x


if __name__ == "__main__":
    B, V, H = 2, 16, 32            # small; module defaults are V=256, H=512
    key = jax.random.PRNGKey(0)
    kx1, kx2, kp = jax.random.split(key, 3)
    params = init_params(kp, V, H)

    # bf16 matmul inputs (+ bf16 elementwise chain on v6e/v7x) vs f32 ref.
    tol = dict(atol=7e-2, rtol=7e-2)

    # Case 1: L not a multiple of the lane alignment -> padded path + masks.
    L1 = 100
    x1 = jax.random.normal(kx1, (B, V, L1), jnp.float32)
    out1 = jax.block_until_ready(visual_conv1d(x1, params))
    ref1 = _reference(x1, params)
    assert out1.shape == (B, V, L1)
    assert jnp.allclose(out1, ref1, **tol), "mismatch vs reference (padded L)"

    # Case 2: L a multiple of 256 -> no pad/slice, no valid masks, edge masks.
    L2 = 256
    x2 = jax.random.normal(kx2, (B, V, L2), jnp.float32)
    out2 = jax.block_until_ready(visual_conv1d(x2, params))
    ref2 = _reference(x2, params)
    assert out2.shape == (B, V, L2)
    assert jnp.allclose(out2, ref2, **tol), "mismatch vs reference (aligned L)"

    print("KERNEL_OK")
</pallas_src>

<mosaic_0001>
module attributes {stable_mosaic.version = 11 : i64} {
  func.func @visual_conv1d_kernel(%arg0: i32, %arg1: memref<1x16x256xf32, #tpu.memory_space<vmem>>, %arg2: memref<32x16xbf16, #tpu.memory_space<vmem>>, %arg3: memref<32x1xf32, #tpu.memory_space<vmem>>, %arg4: memref<32x1xf32, #tpu.memory_space<vmem>>, %arg5: memref<32x1xf32, #tpu.memory_space<vmem>>, %arg6: memref<32x1xf32, #tpu.memory_space<vmem>>, %arg7: memref<32x3xf32, #tpu.memory_space<vmem>>, %arg8: memref<1xf32, #tpu.memory_space<smem>>, %arg9: memref<16x32xbf16, #tpu.memory_space<vmem>>, %arg10: memref<16x1xf32, #tpu.memory_space<vmem>>, %arg11: memref<16x1xf32, #tpu.memory_space<vmem>>, %arg12: memref<1x16x256xf32, #tpu.memory_space<vmem>>) attributes {dimension_semantics = [#tpu.dimension_semantics<parallel>], iteration_bounds = array<i64: 2>, scalar_prefetch = 0 : i64, scratch_operands = 0 : i64, tpu.core_type = #tpu.core_type<tc>, window_params = [{transform_indices = @transform_0, window_bounds = array<i64: 1, 16, 256>}, {pipeline_mode = #tpu.pipeline_mode<synchronous>, transform_indices = @transform_1, window_bounds = array<i64: 32, 16>}, {pipeline_mode = #tpu.pipeline_mode<synchronous>, transform_indices = @transform_2, window_bounds = array<i64: 32, 1>}, {pipeline_mode = #tpu.pipeline_mode<synchronous>, transform_indices = @transform_3, window_bounds = array<i64: 32, 1>}, {pipeline_mode = #tpu.pipeline_mode<synchronous>, transform_indices = @transform_4, window_bounds = array<i64: 32, 1>}, {pipeline_mode = #tpu.pipeline_mode<synchronous>, transform_indices = @transform_5, window_bounds = array<i64: 32, 1>}, {pipeline_mode = #tpu.pipeline_mode<synchronous>, transform_indices = @transform_6, window_bounds = array<i64: 32, 3>}, {transform_indices = @transform_7, window_bounds = array<i64: 1>}, {pipeline_mode = #tpu.pipeline_mode<synchronous>, transform_indices = @transform_8, window_bounds = array<i64: 16, 32>}, {pipeline_mode = #tpu.pipeline_mode<synchronous>, transform_indices = @transform_9, window_bounds = array<i64: 16, 1>}, {pipeline_mode = #tpu.pipeline_mode<synchronous>, transform_indices = @transform_10, window_bounds = array<i64: 16, 1>}, {transform_indices = @transform_11, window_bounds = array<i64: 1, 16, 256>}]} {
    %c0 = arith.constant 0 : index
    %c0_0 = arith.constant 0 : index
    %c0_1 = arith.constant 0 : index
    %0 = vector.load %arg1[%c0, %c0_0, %c0_1] : memref<1x16x256xf32, #tpu.memory_space<vmem>>, vector<1x16x256xf32>
    %1 = vector.shape_cast %0 : vector<1x16x256xf32> to vector<16x256xf32>
    %cst = arith.constant 0.000000e+00 : f32
    %2 = vector.broadcast %cst : f32 to vector<16x256xf32>
    %3 = arith.maximumf %1, %2 : vector<16x256xf32>
    %4 = vector.shape_cast %3 : vector<16x256xf32> to vector<1x16x256xf32>
    %cst_2 = arith.constant dense<0.000000e+00> : vector<1xf32>
    %5 = vector.multi_reduction <add>, %4, %cst_2 [1, 2] : vector<1x16x256xf32> to vector<1xf32>
    %6 = vector.shape_cast %5 : vector<1xf32> to vector<1x1x1xf32>
    %7 = vector.extract %6[0, 0, 0] : f32 from vector<1x1x1xf32>
    %cst_3 = arith.constant 6.250000e-04 : f32
    %8 = arith.mulf %7, %cst_3 : f32
    %9 = arith.mulf %3, %3 : vector<16x256xf32>
    %10 = vector.shape_cast %9 : vector<16x256xf32> to vector<1x16x256xf32>
    %cst_4 = arith.constant dense<0.000000e+00> : vector<1xf32>
    %11 = vector.multi_reduction <add>, %10, %cst_4 [1, 2] : vector<1x16x256xf32> to vector<1xf32>
    %12 = vector.shape_cast %11 : vector<1xf32> to vector<1x1x1xf32>
    %13 = vector.extract %12[0, 0, 0] : f32 from vector<1x1x1xf32>
    %cst_5 = arith.constant 6.250000e-04 : f32
    %14 = arith.mulf %13, %cst_5 : f32
    %15 = arith.mulf %8, %8 : f32
    %16 = arith.subf %14, %15 : f32
    %cst_6 = arith.constant 0.000000e+00 : f32
    %17 = arith.maximumf %16, %cst_6 : f32
    %cst_7 = arith.constant 9.99999993E-9 : f32
    %18 = arith.addf %17, %cst_7 : f32
    %19 = math.rsqrt %18 : f32
    %c0_8 = arith.constant 0 : index
    %c0_9 = arith.constant 0 : index
    %20 = vector.load %arg2[%c0_8, %c0_9] : memref<32x16xbf16, #tpu.memory_space<vmem>>, vector<32x16xbf16>
    %21 = arith.truncf %3 : vector<16x256xf32> to vector<16x256xbf16>
    %cst_10 = arith.constant dense<0.000000e+00> : vector<32x256xf32>
    %22 = tpu.matmul %20, %21, %cst_10 {dimension_numbers = #tpu.dot_dimension_numbers<[1], [0], [0], [1], [0, 0, 1, 1], [], []>} : vector<32x16xbf16>, vector<16x256xbf16>, vector<32x256xf32> -> vector<32x256xf32>
    %cst_11 = arith.constant 0.000000e+00 : f32
    %23 = arith.subf %cst_11, %8 : f32
    %24 = arith.mulf %23, %19 : f32
    %c0_12 = arith.constant 0 : index
    %c0_13 = arith.constant 0 : index
    %25 = vector.load %arg3[%c0_12, %c0_13] : memref<32x1xf32, #tpu.memory_space<vmem>>, vector<32x1xf32>
    %26 = vector.broadcast %24 : f32 to vector<32x1xf32>
    %27 = arith.mulf %26, %25 : vector<32x1xf32>
    %c0_14 = arith.constant 0 : index
    %c0_15 = arith.constant 0 : index
    %28 = vector.load %arg4[%c0_14, %c0_15] : memref<32x1xf32, #tpu.memory_space<vmem>>, vector<32x1xf32>
    %29 = arith.addf %27, %28 : vector<32x1xf32>
    %30 = vector.broadcast %19 : f32 to vector<32x256xf32>
    %31 = arith.mulf %22, %30 : vector<32x256xf32>
    %32 = vector.broadcast %29 : vector<32x1xf32> to vector<32x256xf32>
    %33 = arith.addf %31, %32 : vector<32x256xf32>
    %cst_16 = arith.constant 0.000000e+00 : f32
    %34 = vector.broadcast %cst_16 : f32 to vector<32x256xf32>
    %35 = arith.maximumf %33, %34 : vector<32x256xf32>
    %36 = tpu.iota {dimensions = array<i32: 1>} : vector<1x256xi32>
    %c100_i32 = arith.constant 100 : i32
    %37 = vector.broadcast %c100_i32 : i32 to vector<1x256xi32>
    %38 = arith.cmpi slt, %36, %37 : vector<1x256xi32>
    %cst_17 = arith.constant 0.000000e+00 : f32
    %39 = vector.shape_cast %38 : vector<1x256xi1> to vector<1x256xi1>
    %40 = vector.broadcast %39 : vector<1x256xi1> to vector<32x256xi1>
    %41 = vector.broadcast %cst_17 : f32 to vector<32x256xf32>
    %42 = arith.select %40, %35, %41 : vector<32x256xi1>, vector<32x256xf32>
    %43 = vector.shape_cast %42 : vector<32x256xf32> to vector<1x32x256xf32>
    %cst_18 = arith.constant dense<0.000000e+00> : vector<1xf32>
    %44 = vector.multi_reduction <add>, %43, %cst_18 [1, 2] : vector<1x32x256xf32> to vector<1xf32>
    %45 = vector.shape_cast %44 : vector<1xf32> to vector<1x1x1xf32>
    %46 = vector.extract %45[0, 0, 0] : f32 from vector<1x1x1xf32>
    %cst_19 = arith.constant 3.125000e-04 : f32
    %47 = arith.mulf %46, %cst_19 : f32
    %48 = arith.mulf %42, %42 : vector<32x256xf32>
    %49 = vector.shape_cast %48 : vector<32x256xf32> to vector<1x32x256xf32>
    %cst_20 = arith.constant dense<0.000000e+00> : vector<1xf32>
    %50 = vector.multi_reduction <add>, %49, %cst_20 [1, 2] : vector<1x32x256xf32> to vector<1xf32>
    %51 = vector.shape_cast %50 : vector<1xf32> to vector<1x1x1xf32>
    %52 = vector.extract %51[0, 0, 0] : f32 from vector<1x1x1xf32>
    %cst_21 = arith.constant 3.125000e-04 : f32
    %53 = arith.mulf %52, %cst_21 : f32
    %54 = arith.mulf %47, %47 : f32
    %55 = arith.subf %53, %54 : f32
    %cst_22 = arith.constant 0.000000e+00 : f32
    %56 = arith.maximumf %55, %cst_22 : f32
    %cst_23 = arith.constant 9.99999993E-9 : f32
    %57 = arith.addf %56, %cst_23 : f32
    %58 = math.rsqrt %57 : f32
    %c0_24 = arith.constant 0 : index
    %c0_25 = arith.constant 0 : index
    %59 = vector.load %arg5[%c0_24, %c0_25] : memref<32x1xf32, #tpu.memory_space<vmem>>, vector<32x1xf32>
    %60 = vector.broadcast %58 : f32 to vector<32x1xf32>
    %61 = arith.mulf %59, %60 : vector<32x1xf32>
    %c0_26 = arith.constant 0 : index
    %c0_27 = arith.constant 0 : index
    %62 = vector.load %arg6[%c0_26, %c0_27] : memref<32x1xf32, #tpu.memory_space<vmem>>, vector<32x1xf32>
    %63 = vector.broadcast %47 : f32 to vector<32x1xf32>
    %64 = arith.mulf %63, %61 : vector<32x1xf32>
    %65 = arith.subf %62, %64 : vector<32x1xf32>
    %66 = vector.broadcast %61 : vector<32x1xf32> to vector<32x256xf32>
    %67 = arith.mulf %42, %66 : vector<32x256xf32>
    %68 = vector.broadcast %65 : vector<32x1xf32> to vector<32x256xf32>
    %69 = arith.addf %67, %68 : vector<32x256xf32>
    %cst_28 = arith.constant 0.000000e+00 : f32
    %70 = vector.shape_cast %38 : vector<1x256xi1> to vector<1x256xi1>
    %71 = vector.broadcast %70 : vector<1x256xi1> to vector<32x256xi1>
    %72 = vector.broadcast %cst_28 : f32 to vector<32x256xf32>
    %73 = arith.select %71, %69, %72 : vector<32x256xi1>, vector<32x256xf32>
    %c1_i32 = arith.constant 1 : i32
    %74 = tpu.dynamic_rotate %73 by %c1_i32 dim 1 : vector<32x256xf32>, i32 -> vector<32x256xf32>
    %c255_i32 = arith.constant 255 : i32
    %75 = tpu.dynamic_rotate %73 by %c255_i32 dim 1 : vector<32x256xf32>, i32 -> vector<32x256xf32>
    %c0_29 = arith.constant 0 : index
    %c0_30 = arith.constant 0 : index
    %76 = vector.load %arg7[%c0_29, %c0_30] : memref<32x3xf32, #tpu.memory_space<vmem>>, vector<32x3xf32>
    %77 = vector.extract_strided_slice %76 {offsets = [0, 0], sizes = [32, 1], strides = [1, 1]} : vector<32x3xf32> to vector<32x1xf32>
    %78 = vector.broadcast %77 : vector<32x1xf32> to vector<32x256xf32>
    %79 = arith.mulf %78, %74 : vector<32x256xf32>
    %80 = vector.extract_strided_slice %76 {offsets = [0, 1], sizes = [32, 1], strides = [1, 1]} : vector<32x3xf32> to vector<32x1xf32>
    %81 = vector.broadcast %80 : vector<32x1xf32> to vector<32x256xf32>
    %82 = arith.mulf %81, %73 : vector<32x256xf32>
    %83 = arith.addf %79, %82 : vector<32x256xf32>
    %84 = vector.extract_strided_slice %76 {offsets = [0, 2], sizes = [32, 1], strides = [1, 1]} : vector<32x3xf32> to vector<32x1xf32>
    %85 = vector.broadcast %84 : vector<32x1xf32> to vector<32x256xf32>
    %86 = arith.mulf %85, %75 : vector<32x256xf32>
    %87 = arith.addf %83, %86 : vector<32x256xf32>
    %c0_31 = arith.constant 0 : index
    %88 = memref.load %arg8[%c0_31] : memref<1xf32, #tpu.memory_space<smem>>
    %cst_32 = arith.constant 0.000000e+00 : f32
    %89 = vector.broadcast %cst_32 : f32 to vector<32x256xf32>
    %90 = arith.cmpf ogt, %87, %89 : vector<32x256xf32>
    %91 = vector.broadcast %88 : f32 to vector<32x256xf32>
    %92 = arith.mulf %91, %87 : vector<32x256xf32>
    %93 = arith.select %90, %87, %92 : vector<32x256xi1>, vector<32x256xf32>
    %cst_33 = arith.constant 0.000000e+00 : f32
    %94 = vector.shape_cast %38 : vector<1x256xi1> to vector<1x256xi1>
    %95 = vector.broadcast %94 : vector<1x256xi1> to vector<32x256xi1>
    %96 = vector.broadcast %cst_33 : f32 to vector<32x256xf32>
    %97 = arith.select %95, %93, %96 : vector<32x256xi1>, vector<32x256xf32>
    %98 = vector.shape_cast %97 : vector<32x256xf32> to vector<1x32x256xf32>
    %cst_34 = arith.constant dense<0.000000e+00> : vector<1xf32>
    %99 = vector.multi_reduction <add>, %98, %cst_34 [1, 2] : vector<1x32x256xf32> to vector<1xf32>
    %100 = vector.shape_cast %99 : vector<1xf32> to vector<1x1x1xf32>
    %101 = vector.extract %100[0, 0, 0] : f32 from vector<1x1x1xf32>
    %cst_35 = arith.constant 3.125000e-04 : f32
    %102 = arith.mulf %101, %cst_35 : f32
    %103 = arith.mulf %97, %97 : vector<32x256xf32>
    %104 = vector.shape_cast %103 : vector<32x256xf32> to vector<1x32x256xf32>
    %cst_36 = arith.constant dense<0.000000e+00> : vector<1xf32>
    %105 = vector.multi_reduction <add>, %104, %cst_36 [1, 2] : vector<1x32x256xf32> to vector<1xf32>
    %106 = vector.shape_cast %105 : vector<1xf32> to vector<1x1x1xf32>
    %107 = vector.extract %106[0, 0, 0] : f32 from vector<1x1x1xf32>
    %cst_37 = arith.constant 3.125000e-04 : f32
    %108 = arith.mulf %107, %cst_37 : f32
    %109 = arith.mulf %102, %102 : f32
    %110 = arith.subf %108, %109 : f32
    %cst_38 = arith.constant 0.000000e+00 : f32
    %111 = arith.maximumf %110, %cst_38 : f32
    %cst_39 = arith.constant 9.99999993E-9 : f32
    %112 = arith.addf %111, %cst_39 : f32
    %113 = math.rsqrt %112 : f32
    %c0_40 = arith.constant 0 : index
    %c0_41 = arith.constant 0 : index
    %114 = vector.load %arg9[%c0_40, %c0_41] : memref<16x32xbf16, #tpu.memory_space<vmem>>, vector<16x32xbf16>
    %115 = arith.truncf %97 : vector<32x256xf32> to vector<32x256xbf16>
    %cst_42 = arith.constant dense<0.000000e+00> : vector<16x256xf32>
    %116 = tpu.matmul %114, %115, %cst_42 {dimension_numbers = #tpu.dot_dimension_numbers<[1], [0], [0], [1], [0, 0, 1, 1], [], []>} : vector<16x32xbf16>, vector<32x256xbf16>, vector<16x256xf32> -> vector<16x256xf32>
    %cst_43 = arith.constant 0.000000e+00 : f32
    %117 = arith.subf %cst_43, %102 : f32
    %118 = arith.mulf %117, %113 : f32
    %c0_44 = arith.constant 0 : index
    %c0_45 = arith.constant 0 : index
    %119 = vector.load %arg10[%c0_44, %c0_45] : memref<16x1xf32, #tpu.memory_space<vmem>>, vector<16x1xf32>
    %120 = vector.broadcast %118 : f32 to vector<16x1xf32>
    %121 = arith.mulf %120, %119 : vector<16x1xf32>
    %c0_46 = arith.constant 0 : index
    %c0_47 = arith.constant 0 : index
    %122 = vector.load %arg11[%c0_46, %c0_47] : memref<16x1xf32, #tpu.memory_space<vmem>>, vector<16x1xf32>
    %123 = arith.addf %121, %122 : vector<16x1xf32>
    %124 = vector.broadcast %113 : f32 to vector<16x256xf32>
    %125 = arith.mulf %116, %124 : vector<16x256xf32>
    %c0_48 = arith.constant 0 : index
    %c0_49 = arith.constant 0 : index
    %c0_50 = arith.constant 0 : index
    %126 = vector.load %arg1[%c0_48, %c0_49, %c0_50] : memref<1x16x256xf32, #tpu.memory_space<vmem>>, vector<1x16x256xf32>
    %127 = vector.shape_cast %126 : vector<1x16x256xf32> to vector<16x256xf32>
    %128 = vector.broadcast %123 : vector<16x1xf32> to vector<16x256xf32>
    %129 = arith.addf %128, %127 : vector<16x256xf32>
    %130 = arith.addf %125, %129 : vector<16x256xf32>
    %c0_51 = arith.constant 0 : index
    %c0_52 = arith.constant 0 : index
    %c0_53 = arith.constant 0 : index
    %131 = vector.load %arg12[%c0_51, %c0_52, %c0_53] : memref<1x16x256xf32, #tpu.memory_space<vmem>>, vector<1x16x256xf32>
    %132 = vector.shape_cast %131 : vector<1x16x256xf32> to vector<16x256xf32>
    %133 = vector.shape_cast %130 : vector<16x256xf32> to vector<1x16x256xf32>
    tpu.vector_store %arg12[%c0_51, %c0_52, %c0_53], %133 {strides = array<i32>} : memref<1x16x256xf32, #tpu.memory_space<vmem>>, vector<1x16x256xf32>,
    return
  }
  func.func @transform_0(%arg0: i32) -> (i32, i32, i32) {
    %c0_i32 = arith.constant 0 : i32
    %c0_i32_0 = arith.constant 0 : i32
    %c0_i32_1 = arith.constant 0 : i32
    return %arg0, %c0_i32, %c0_i32_0 : i32, i32, i32
  }
  func.func @transform_1(%arg0: i32) -> (i32, i32) {
    %c0_i32 = arith.constant 0 : i32
    %c0_i32_0 = arith.constant 0 : i32
    %c0_i32_1 = arith.constant 0 : i32
    return %c0_i32, %c0_i32_0 : i32, i32
  }
  func.func @transform_2(%arg0: i32) -> (i32, i32) {
    %c0_i32 = arith.constant 0 : i32
    %c0_i32_0 = arith.constant 0 : i32
    %c0_i32_1 = arith.constant 0 : i32
    return %c0_i32, %c0_i32_0 : i32, i32
  }
  func.func @transform_3(%arg0: i32) -> (i32, i32) {
    %c0_i32 = arith.constant 0 : i32
    %c0_i32_0 = arith.constant 0 : i32
    %c0_i32_1 = arith.constant 0 : i32
    return %c0_i32, %c0_i32_0 : i32, i32
  }
  func.func @transform_4(%arg0: i32) -> (i32, i32) {
    %c0_i32 = arith.constant 0 : i32
    %c0_i32_0 = arith.constant 0 : i32
    %c0_i32_1 = arith.constant 0 : i32
    return %c0_i32, %c0_i32_0 : i32, i32
  }
  func.func @transform_5(%arg0: i32) -> (i32, i32) {
    %c0_i32 = arith.constant 0 : i32
    %c0_i32_0 = arith.constant 0 : i32
    %c0_i32_1 = arith.constant 0 : i32
    return %c0_i32, %c0_i32_0 : i32, i32
  }
  func.func @transform_6(%arg0: i32) -> (i32, i32) {
    %c0_i32 = arith.constant 0 : i32
    %c0_i32_0 = arith.constant 0 : i32
    %c0_i32_1 = arith.constant 0 : i32
    return %c0_i32, %c0_i32_0 : i32, i32
  }
  func.func @transform_7(%arg0: i32) -> i32 {
    %c0_i32 = arith.constant 0 : i32
    %c0_i32_0 = arith.constant 0 : i32
    return %c0_i32 : i32
  }
  func.func @transform_8(%arg0: i32) -> (i32, i32) {
    %c0_i32 = arith.constant 0 : i32
    %c0_i32_0 = arith.constant 0 : i32
    %c0_i32_1 = arith.constant 0 : i32
    return %c0_i32, %c0_i32_0 : i32, i32
  }
  func.func @transform_9(%arg0: i32) -> (i32, i32) {
    %c0_i32 = arith.constant 0 : i32
    %c0_i32_0 = arith.constant 0 : i32
    %c0_i32_1 = arith.constant 0 : i32
    return %c0_i32, %c0_i32_0 : i32, i32
  }
  func.func @transform_10(%arg0: i32) -> (i32, i32) {
    %c0_i32 = arith.constant 0 : i32
    %c0_i32_0 = arith.constant 0 : i32
    %c0_i32_1 = arith.constant 0 : i32
    return %c0_i32, %c0_i32_0 : i32, i32
  }
  func.func @transform_11(%arg0: i32) -> (i32, i32, i32) {
    %c0_i32 = arith.constant 0 : i32
    %c0_i32_0 = arith.constant 0 : i32
    %c0_i32_1 = arith.constant 0 : i32
    return %arg0, %c0_i32, %c0_i32_0 : i32, i32, i32
  }
}

</mosaic_0001>

<llo_original>
// kernel: tpu_custom_call.1
$region0: #{tpu_custom_call.1}
  #allocation0 [shape = 'u32[]', space=smem, size = 0x4, offset = 0x4, fixed_abs, tag = 'smem constant byte address 0x4 - core index']
  #allocation1 [shape = 'u32[144,128]{1,0:T(1,128)}', space=vmem, size = 0x12000, scoped, tag = 'internal scratch']
  #allocation2 [shape = 'f32[1]{0:T(128)S(6)}', space=smem, size = 0x200, scoped, tag = 'scoped memory for tpu_custom_call.1']
  %s0 = inlined_call_operand.vmem [shape: f32[2,16,256], index: 0, kind: input, shape index: {}]
  %s1 = inlined_call_operand.vmem [shape: bf16[32,16], index: 1, kind: input, shape index: {}]
  %s2 = inlined_call_operand.vmem [shape: f32[32,1], index: 2, kind: input, shape index: {}]
  %s3 = inlined_call_operand.vmem [shape: f32[32,1], index: 3, kind: input, shape index: {}]
  %s4 = inlined_call_operand.vmem [shape: f32[32,1], index: 4, kind: input, shape index: {}]
  %s5 = inlined_call_operand.vmem [shape: f32[32,1], index: 5, kind: input, shape index: {}]
  %s6 = inlined_call_operand.vmem [shape: f32[32,3], index: 6, kind: input, shape index: {}]
  %s7 = inlined_call_operand.<no memory space> [shape: f32[1], index: 7, kind: input, shape index: {}]
  %s8 = inlined_call_operand.vmem [shape: bf16[16,32], index: 8, kind: input, shape index: {}]
  %s9 = inlined_call_operand.vmem [shape: f32[16,1], index: 9, kind: input, shape index: {}]
  %s10 = inlined_call_operand.vmem [shape: f32[16,1], index: 10, kind: input, shape index: {}]
  %s11 = inlined_call_operand.hbm [shape: f32[2,16,256], index: 11, kind: output, shape index: {}]
  %s12 = sld [smem:[#allocation0]]
  $region77: #{tpu_custom_call.1} parent=0
    _
  %s14 = ssub.s32 1, %s12
  %s15 = scalar_select 0, %s14, %s12
  %16 = sst [smem:[#allocation2]] %s7
  $region1: #{tpu_custom_call.1} parent=0
    #allocation3 [shape = 'u8[32768]{0}', space=vmem, size = 0x8000, scoped, tag = 'output window, operand 0']
    #allocation4 [shape = 's32[2]{0}', space=sflag, size = 0x8, scoped, tag = 'scoped memory for tpu_custom_call.1']
    %17 = vsyncpa [#allocation4], 0
    %s18 = scalar_lea.sflag [#allocation4], 1
    %19 = vsyncpa %s18, 0
    loop: start=0, step=1, limit=4
    $region2: #{tpu_custom_call.1} parent=1 // loop_pre_header
      _
    $region3: #{tpu_custom_call.1} parent=1 // loop_header
      %s21 = sphi 0, %s25
      %p22 = scmp.ge.s32.totalorder %s21, 4
      %s31 = sphi 0, %s33
      %s34 = sphi 0, %s31
      %s35 = sphi 0, %s34
      %s51 = sphi 0, %s35
      %s55 = sphi 0, %s55
      %s57 = sphi 0, %s55
      %s58 = sphi 0, %s57
      %s72 = sphi 0, %s58
      %s76 = sphi 0, %s76
      %s78 = sphi 0, %s76
      %s79 = sphi 0, %s78
      %s93 = sphi 0, %s79
      %s97 = sphi 0, %s97
      %s99 = sphi 0, %s97
      %s100 = sphi 0, %s99
      %s114 = sphi 0, %s100
      %s118 = sphi 0, %s118
      %s120 = sphi 0, %s118
      %s121 = sphi 0, %s120
      %s135 = sphi 0, %s121
      %s139 = sphi 0, %s139
      %s141 = sphi 0, %s139
      %s142 = sphi 0, %s141
      %s156 = sphi 0, %s142
      %s160 = sphi 0, %s160
      %s162 = sphi 0, %s160
      %s163 = sphi 0, %s162
      %s177 = sphi 0, %s163
      %s181 = sphi 0, %s181
      %s183 = sphi 0, %s181
      %s184 = sphi 0, %s183
      %s198 = sphi 0, %s184
      %s202 = sphi 0, %s202
      %s204 = sphi 0, %s202
      %s205 = sphi 0, %s204
      %s219 = sphi 0, %s205
      %s223 = sphi 0, %s223
      %s225 = sphi 0, %s223
      %s226 = sphi 0, %s225
      %s240 = sphi 0, %s226
      %s244 = sphi 0, %s244
      %s246 = sphi 0, %s244
      %s247 = sphi 0, %s246
      %s261 = sphi 0, %s247
      %s267 = sphi 0, %s269
      %s270 = sphi 0, %s267
      %s271 = sphi 0, %s270
      %s287 = sphi 0, %s271
    $region4: #{tpu_custom_call.1} parent=1 // loop_header_branch
      %24 = sbr.rel (%p22) target = $region8
    $region5: #{tpu_custom_call.1} parent=1 // loop_body
      %s26 = ssub.s32 %s21, 1
      %s27 = ssub.s32 %s21, 2
      %s28 = sadd.s32 %s21, 1
      %s29 = ssub.s32 %s21, %s28
      %p30 = scmp.eq.s32.totalorder %s29, 0
      %s32 = sadd.s32 %s31, 1
      %s33 = scalar_select %p30, %s31, %s32
      %p36 = pneg %p30
      %p37 = scmp.eq.s32.totalorder %s21, 1
      %p38 = por %p36, %p37
      %p39 = scmp.ne.s32.totalorder %s31, %s34
      %p40 = scmp.eq.s32.totalorder %s21, 0
      %p41 = por %p39, %p40
      %p42 = scmp.ne.s32.totalorder %s31, %s34
      %p43 = scmp.eq.s32.totalorder %s26, 1
      %p44 = por %p42, %p43
      %p45 = scmp.ne.s32.totalorder %s34, %s35
      %p46 = scmp.eq.s32.totalorder %s26, 0
      %p47 = por %p45, %p46
      %p48 = scmp.ne.s32.totalorder %s34, %s35
      %p49 = scmp.eq.s32.totalorder %s27, 1
      %p50 = por %p48, %p49
      %p52 = scmp.ne.s32.totalorder %s35, %s51
      %p53 = scmp.eq.s32.totalorder %s27, 0
      %p54 = por %p52, %p53
      %s56 = sadd.s32 %s55, 1
      %p59 = scmp.eq.s32.totalorder %s21, 1
      %p60 = scmp.ne.s32.totalorder %s55, %s57
      %p61 = scmp.eq.s32.totalorder %s21, 0
      %p62 = por %p60, %p61
      %p63 = scmp.ne.s32.totalorder %s55, %s57
      %p64 = scmp.eq.s32.totalorder %s26, 1
      %p65 = por %p63, %p64
      %p66 = scmp.ne.s32.totalorder %s57, %s58
      %p67 = scmp.eq.s32.totalorder %s26, 0
      %p68 = por %p66, %p67
      %p69 = scmp.ne.s32.totalorder %s57, %s58
      %p70 = scmp.eq.s32.totalorder %s27, 1
      %p71 = por %p69, %p70
      %p73 = scmp.ne.s32.totalorder %s58, %s72
      %p74 = scmp.eq.s32.totalorder %s27, 0
      %p75 = por %p73, %p74
      %s77 = sadd.s32 %s76, 1
      %p80 = scmp.eq.s32.totalorder %s21, 1
      %p81 = scmp.ne.s32.totalorder %s76, %s78
      %p82 = scmp.eq.s32.totalorder %s21, 0
      %p83 = por %p81, %p82
      %p84 = scmp.ne.s32.totalorder %s76, %s78
      %p85 = scmp.eq.s32.totalorder %s26, 1
      %p86 = por %p84, %p85
      %p87 = scmp.ne.s32.totalorder %s78, %s79
      %p88 = scmp.eq.s32.totalorder %s26, 0
      %p89 = por %p87, %p88
      %p90 = scmp.ne.s32.totalorder %s78, %s79
      %p91 = scmp.eq.s32.totalorder %s27, 1
      %p92 = por %p90, %p91
      %p94 = scmp.ne.s32.totalorder %s79, %s93
      %p95 = scmp.eq.s32.totalorder %s27, 0
      %p96 = por %p94, %p95
      %s98 = sadd.s32 %s97, 1
      %p101 = scmp.eq.s32.totalorder %s21, 1
      %p102 = scmp.ne.s32.totalorder %s97, %s99
      %p103 = scmp.eq.s32.totalorder %s21, 0
      %p104 = por %p102, %p103
      %p105 = scmp.ne.s32.totalorder %s97, %s99
      %p106 = scmp.eq.s32.totalorder %s26, 1
      %p107 = por %p105, %p106
      %p108 = scmp.ne.s32.totalorder %s99, %s100
      %p109 = scmp.eq.s32.totalorder %s26, 0
      %p110 = por %p108, %p109
      %p111 = scmp.ne.s32.totalorder %s99, %s100
      %p112 = scmp.eq.s32.totalorder %s27, 1
      %p113 = por %p111, %p112
      %p115 = scmp.ne.s32.totalorder %s100, %s114
      %p116 = scmp.eq.s32.totalorder %s27, 0
      %p117 = por %p115, %p116
      %s119 = sadd.s32 %s118, 1
      %p122 = scmp.eq.s32.totalorder %s21, 1
      %p123 = scmp.ne.s32.totalorder %s118, %s120
      %p124 = scmp.eq.s32.totalorder %s21, 0
      %p125 = por %p123, %p124
      %p126 = scmp.ne.s32.totalorder %s118, %s120
      %p127 = scmp.eq.s32.totalorder %s26, 1
      %p128 = por %p126, %p127
      %p129 = scmp.ne.s32.totalorder %s120, %s121
      %p130 = scmp.eq.s32.totalorder %s26, 0
      %p131 = por %p129, %p130
      %p132 = scmp.ne.s32.totalorder %s120, %s121
      %p133 = scmp.eq.s32.totalorder %s27, 1
      %p134 = por %p132, %p133
      %p136 = scmp.ne.s32.totalorder %s121, %s135
      %p137 = scmp.eq.s32.totalorder %s27, 0
      %p138 = por %p136, %p137
      %s140 = sadd.s32 %s139, 1
      %p143 = scmp.eq.s32.totalorder %s21, 1
      %p144 = scmp.ne.s32.totalorder %s139, %s141
      %p145 = scmp.eq.s32.totalorder %s21, 0
      %p146 = por %p144, %p145
      %p147 = scmp.ne.s32.totalorder %s139, %s141
      %p148 = scmp.eq.s32.totalorder %s26, 1
      %p149 = por %p147, %p148
      %p150 = scmp.ne.s32.totalorder %s141, %s142
      %p151 = scmp.eq.s32.totalorder %s26, 0
      %p152 = por %p150, %p151
      %p153 = scmp.ne.s32.totalorder %s141, %s142
      %p154 = scmp.eq.s32.totalorder %s27, 1
      %p155 = por %p153, %p154
      %p157 = scmp.ne.s32.totalorder %s142, %s156
      %p158 = scmp.eq.s32.totalorder %s27, 0
      %p159 = por %p157, %p158
      %s161 = sadd.s32 %s160, 1
      %p164 = scmp.eq.s32.totalorder %s21, 1
      %p165 = scmp.ne.s32.totalorder %s160, %s162
      %p166 = scmp.eq.s32.totalorder %s21, 0
      %p167 = por %p165, %p166
      %p168 = scmp.ne.s32.totalorder %s160, %s162
      %p169 = scmp.eq.s32.totalorder %s26, 1
      %p170 = por %p168, %p169
      %p171 = scmp.ne.s32.totalorder %s162, %s163
      %p172 = scmp.eq.s32.totalorder %s26, 0
      %p173 = por %p171, %p172
      %p174 = scmp.ne.s32.totalorder %s162, %s163
      %p175 = scmp.eq.s32.totalorder %s27, 1
      %p176 = por %p174, %p175
      %p178 = scmp.ne.s32.totalorder %s163, %s177
      %p179 = scmp.eq.s32.totalorder %s27, 0
      %p180 = por %p178, %p179
      %s182 = sadd.s32 %s181, 1
      %p185 = scmp.eq.s32.totalorder %s21, 1
      %p186 = scmp.ne.s32.totalorder %s181, %s183
      %p187 = scmp.eq.s32.totalorder %s21, 0
      %p188 = por %p186, %p187
      %p189 = scmp.ne.s32.totalorder %s181, %s183
      %p190 = scmp.eq.s32.totalorder %s26, 1
      %p191 = por %p189, %p190
      %p192 = scmp.ne.s32.totalorder %s183, %s184
      %p193 = scmp.eq.s32.totalorder %s26, 0
      %p194 = por %p192, %p193
      %p195 = scmp.ne.s32.totalorder %s183, %s184
      %p196 = scmp.eq.s32.totalorder %s27, 1
      %p197 = por %p195, %p196
      %p199 = scmp.ne.s32.totalorder %s184, %s198
      %p200 = scmp.eq.s32.totalorder %s27, 0
      %p201 = por %p199, %p200
      %s203 = sadd.s32 %s202, 1
      %p206 = scmp.eq.s32.totalorder %s21, 1
      %p207 = scmp.ne.s32.totalorder %s202, %s204
      %p208 = scmp.eq.s32.totalorder %s21, 0
      %p209 = por %p207, %p208
      %p210 = scmp.ne.s32.totalorder %s202, %s204
      %p211 = scmp.eq.s32.totalorder %s26, 1
      %p212 = por %p210, %p211
      %p213 = scmp.ne.s32.totalorder %s204, %s205
      %p214 = scmp.eq.s32.totalorder %s26, 0
      %p215 = por %p213, %p214
      %p216 = scmp.ne.s32.totalorder %s204, %s205
      %p217 = scmp.eq.s32.totalorder %s27, 1
      %p218 = por %p216, %p217
      %p220 = scmp.ne.s32.totalorder %s205, %s219
      %p221 = scmp.eq.s32.totalorder %s27, 0
      %p222 = por %p220, %p221
      %s224 = sadd.s32 %s223, 1
      %p227 = scmp.eq.s32.totalorder %s21, 1
      %p228 = scmp.ne.s32.totalorder %s223, %s225
      %p229 = scmp.eq.s32.totalorder %s21, 0
      %p230 = por %p228, %p229
      %p231 = scmp.ne.s32.totalorder %s223, %s225
      %p232 = scmp.eq.s32.totalorder %s26, 1
      %p233 = por %p231, %p232
      %p234 = scmp.ne.s32.totalorder %s225, %s226
      %p235 = scmp.eq.s32.totalorder %s26, 0
      %p236 = por %p234, %p235
      %p237 = scmp.ne.s32.totalorder %s225, %s226
      %p238 = scmp.eq.s32.totalorder %s27, 1
      %p239 = por %p237, %p238
      %p241 = scmp.ne.s32.totalorder %s226, %s240
      %p242 = scmp.eq.s32.totalorder %s27, 0
      %p243 = por %p241, %p242
      %s245 = sadd.s32 %s244, 1
      %p248 = scmp.eq.s32.totalorder %s21, 1
      %p249 = scmp.ne.s32.totalorder %s244, %s246
      %p250 = scmp.eq.s32.totalorder %s21, 0
      %p251 = por %p249, %p250
      %p252 = scmp.ne.s32.totalorder %s244, %s246
      %p253 = scmp.eq.s32.totalorder %s26, 1
      %p254 = por %p252, %p253
      %p255 = scmp.ne.s32.totalorder %s246, %s247
      %p256 = scmp.eq.s32.totalorder %s26, 0
      %p257 = por %p255, %p256
      %p258 = scmp.ne.s32.totalorder %s246, %s247
      %p259 = scmp.eq.s32.totalorder %s27, 1
      %p260 = por %p258, %p259
      %p262 = scmp.ne.s32.totalorder %s247, %s261
      %p263 = scmp.eq.s32.totalorder %s27, 0
      %p264 = por %p262, %p263
      %s265 = ssub.s32 %s21, %s28
      %p266 = scmp.eq.s32.totalorder %s265, 0
      %s268 = sadd.s32 %s267, 1
      %s269 = scalar_select %p266, %s267, %s268
      %p272 = pneg %p266
      %p273 = scmp.eq.s32.totalorder %s21, 1
      %p274 = por %p272, %p273
      %p275 = scmp.ne.s32.totalorder %s267, %s270
      %p276 = scmp.eq.s32.totalorder %s21, 0
      %p277 = por %p275, %p276
      %p278 = scmp.ne.s32.totalorder %s267, %s270
      %p279 = scmp.eq.s32.totalorder %s26, 1
      %p280 = por %p278, %p279
      %p281 = scmp.ne.s32.totalorder %s270, %s271
      %p282 = scmp.eq.s32.totalorder %s26, 0
      %p283 = por %p281, %p282
      %p284 = scmp.ne.s32.totalorder %s270, %s271
      %p285 = scmp.eq.s32.totalorder %s27, 1
      %p286 = por %p284, %p285
      %p288 = scmp.ne.s32.totalorder %s271, %s287
      %p289 = scmp.eq.s32.totalorder %s27, 0
      %p290 = por %p288, %p289
      %p291 = scmp.le.s32.totalorder 1, %s21
      %p292 = scmp.lt.s32.totalorder %s21, 3
      %p293 = pnand %p291, %p292
      %p294 = pneg %p293
      // Predicated region
      $region9: #{tpu_custom_call.1} parent=5 // pred_check
        _
      $region10: #{tpu_custom_call.1} parent=5 // pred_check_branch
        %296 = sbr.rel (%p293) target = $region12
      $region11: #{tpu_custom_call.1} parent=5 // pred_region
        %s297 = ssub.s32 %s21, 1
        // Predicated region
        $region13: #{tpu_custom_call.1} parent=11 // pred_check
          %p298 = pneg %p68
        $region14: #{tpu_custom_call.1} parent=11 // pred_check_branch
          %300 = sbr.rel (%p298) target = $region16
        $region15: #{tpu_custom_call.1} parent=11 // pred_region
          _
        $region16: #{tpu_custom_call.1} parent=11 // pred_fallthru
          _
        // Predicated region
        $region17: #{tpu_custom_call.1} parent=11 // pred_check
          %p301 = pneg %p89
        $region18: #{tpu_custom_call.1} parent=11 // pred_check_branch
          %303 = sbr.rel (%p301) target = $region20
        $region19: #{tpu_custom_call.1} parent=11 // pred_region
          _
        $region20: #{tpu_custom_call.1} parent=11 // pred_fallthru
          _
        // Predicated region
        $region21: #{tpu_custom_call.1} parent=11 // pred_check
          %p304 = pneg %p110
        $region22: #{tpu_custom_call.1} parent=11 // pred_check_branch
          %306 = sbr.rel (%p304) target = $region24
        $region23: #{tpu_custom_call.1} parent=11 // pred_region
          _
        $region24: #{tpu_custom_call.1} parent=11 // pred_fallthru
          _
        // Predicated region
        $region25: #{tpu_custom_call.1} parent=11 // pred_check
          %p307 = pneg %p131
        $region26: #{tpu_custom_call.1} parent=11 // pred_check_branch
          %309 = sbr.rel (%p307) target = $region28
        $region27: #{tpu_custom_call.1} parent=11 // pred_region
          _
        $region28: #{tpu_custom_call.1} parent=11 // pred_fallthru
          _
        // Predicated region
        $region29: #{tpu_custom_call.1} parent=11 // pred_check
          %p310 = pneg %p152
        $region30: #{tpu_custom_call.1} parent=11 // pred_check_branch
          %312 = sbr.rel (%p310) target = $region32
        $region31: #{tpu_custom_call.1} parent=11 // pred_region
          _
        $region32: #{tpu_custom_call.1} parent=11 // pred_fallthru
          _
        // Predicated region
        $region33: #{tpu_custom_call.1} parent=11 // pred_check
          %p313 = pneg %p173
        $region34: #{tpu_custom_call.1} parent=11 // pred_check_branch
          %315 = sbr.rel (%p313) target = $region36
        $region35: #{tpu_custom_call.1} parent=11 // pred_region
          _
        $region36: #{tpu_custom_call.1} parent=11 // pred_fallthru
          _
        // Predicated region
        $region37: #{tpu_custom_call.1} parent=11 // pred_check
          %p316 = pneg %p194
        $region38: #{tpu_custom_call.1} parent=11 // pred_check_branch
          %318 = sbr.rel (%p316) target = $region40
        $region39: #{tpu_custom_call.1} parent=11 // pred_region
          _
        $region40: #{tpu_custom_call.1} parent=11 // pred_fallthru
          _
        // Predicated region
        $region41: #{tpu_custom_call.1} parent=11 // pred_check
          %p319 = pneg %p215
        $region42: #{tpu_custom_call.1} parent=11 // pred_check_branch
          %321 = sbr.rel (%p319) target = $region44
        $region43: #{tpu_custom_call.1} parent=11 // pred_region
          _
        $region44: #{tpu_custom_call.1} parent=11 // pred_fallthru
          _
        // Predicated region
        $region45: #{tpu_custom_call.1} parent=11 // pred_check
          %p322 = pneg %p236
        $region46: #{tpu_custom_call.1} parent=11 // pred_check_branch
          %324 = sbr.rel (%p322) target = $region48
        $region47: #{tpu_custom_call.1} parent=11 // pred_region
          _
        $region48: #{tpu_custom_call.1} parent=11 // pred_fallthru
          _
        // Predicated region
        $region49: #{tpu_custom_call.1} parent=11 // pred_check
          %p325 = pneg %p257
        $region50: #{tpu_custom_call.1} parent=11 // pred_check_branch
          %327 = sbr.rel (%p325) target = $region52
        $region51: #{tpu_custom_call.1} parent=11 // pred_region
          _
        $region52: #{tpu_custom_call.1} parent=11 // pred_fallthru
          _
      $region12: #{tpu_custom_call.1} parent=5 // pred_fallthru
        _
      %p328 = scmp.lt.s32.totalorder %s21, 2
      // Predicated region
      $region53: #{tpu_custom_call.1} parent=5 // pred_check
        %p329 = pneg %p328
      $region54: #{tpu_custom_call.1} parent=5 // pred_check_branch
        %331 = sbr.rel (%p329) target = $region56
      $region55: #{tpu_custom_call.1} parent=5 // pred_region
        // Predicated region
        $region57: #{tpu_custom_call.1} parent=55 // pred_check
          %p332 = pneg %p41
        $region58: #{tpu_custom_call.1} parent=55 // pred_check_branch
          %334 = sbr.rel (%p332) target = $region60
        $region59: #{tpu_custom_call.1} parent=55 // pred_region
          %p335 = scmp.lt.s32.totalorder %s21, 1
          %s336 = scalar_select %p335, %s21, 1
          %s337 = smul.addr %s336, 4
          %s338 = smul.addr %s337, 8
          %s339 = scalar_lea.vmem %s0, %s338
        $region60: #{tpu_custom_call.1} parent=55 // pred_fallthru
          _
      $region56: #{tpu_custom_call.1} parent=5 // pred_fallthru
        _
      %p340 = scmp.le.s32.totalorder 1, %s21
      %p341 = scmp.lt.s32.totalorder %s21, 3
      %p342 = pnand %p340, %p341
      %p343 = pneg %p342
      // Predicated region
      $region61: #{tpu_custom_call.1} parent=5 // pred_check
        _
      $region62: #{tpu_custom_call.1} parent=5 // pred_check_branch
        %345 = sbr.rel (%p342) target = $region64
      $region63: #{tpu_custom_call.1} parent=5 // pred_region
        %s346 = ssub.s32 %s21, 1
        %p347 = scmp.lt.s32.totalorder %s26, 1
        %s348 = scalar_select %p347, %s26, 1
        %s349 = smul.addr %s348, 4
        %s350 = smul.addr %s349, 8
        %s351 = scalar_lea.vmem %s0, %s350
        %p352 = pneg %p47
        %p353 = pneg %p44
        %p354 = pneg %p68
        %p355 = pneg %p65
        %p356 = pneg %p89
        %p357 = pneg %p86
        %p358 = pneg %p110
        %p359 = pneg %p107
        %p360 = pneg %p131
        %p361 = pneg %p128
        %p362 = pneg %p152
        %p363 = pneg %p149
        %p364 = pneg %p173
        %p365 = pneg %p170
        %p366 = pneg %p194
        %p367 = pneg %p191
        %p368 = pneg %p215
        %p369 = pneg %p212
        %p370 = pneg %p236
        %p371 = pneg %p233
        %p372 = pneg %p257
        %p373 = pneg %p254
        %p374 = pneg %p283
        %p375 = pneg %p280
        %s376 = sand.u32 %s270, 1
        %s377 = scalar_lea.sflag [#allocation4], %s376
        %s378 = sand.u32 %s270, 1
        %s379 = smul.addr %s378, 32
        %s380 = scalar_lea.vmem [#allocation3], %s379
        %p381 = scmp.lt.s32.totalorder %s26, 1
        %s382 = scalar_select %p381, %s26, 1
        %s383 = smul.addr %s382, 4
        %s384 = smul.addr %s383, 8
        %s385 = scalar_lea.vmem %s0, %s384
        %v387 = vld [vmem:[%s385] sm:$0xff]
        %v388 = vld [vmem:[%s385 + $0x8] sm:$0xff]
        %v389 = vld [vmem:[%s385 + $0x10] sm:$0xff]
        %v390 = vld [vmem:[%s385 + $0x18] sm:$0xff]
        %v391 = vmax.f32 %v387, 0.0
        %v392 = vmax.f32 %v388, 0.0
        %v393 = vmax.f32 %v389, 0.0
        %v394 = vmax.f32 %v390, 0.0
        %v395 = vadd.f32 %v391, %v392
        %v396 = vadd.f32 %v395, %v393
        %v397 = vadd.f32 %v396, %v394
        %398 = vadd.xlane.f32.xlu0 %v397
        %v399 = vpop.xlane.xlu0 %398
        %v400 = vrot.slane %v399, 4
        %v401 = vadd.f32 %v399, %v400
        %v402 = vrot.slane %v401, 2
        %v403 = vadd.f32 %v401, %v402
        %v404 = vrot.slane %v403, 1
        %v405 = vadd.f32 %v403, %v404
        %s406 = vtos %v405
        %s407 = smul.f32 %s406, 0.000625
        %v408 = vmul.f32 %v391, %v391
        %v409 = vmul.f32 %v392, %v392
        %v410 = vmul.f32 %v393, %v393
        %v411 = vmul.f32 %v394, %v394
        %v412 = vadd.f32 %v408, %v409
        %v413 = vadd.f32 %v412, %v410
        %v414 = vadd.f32 %v413, %v411
        %415 = vadd.xlane.f32.xlu0 %v414
        %v416 = vpop.xlane.xlu0 %415
        %v417 = vrot.slane %v416, 4
        %v418 = vadd.f32 %v416, %v417
        %v419 = vrot.slane %v418, 2
        %v420 = vadd.f32 %v418, %v419
        %v421 = vrot.slane %v420, 1
        %v422 = vadd.f32 %v420, %v421
        %s423 = vtos %v422
        %s424 = smul.f32 %s423, 0.000625
        %s425 = smul.f32 %s407, %s407
        %s426 = ssub.f32 %s424, %s425
        %s427 = smax.f32 %s426, 0.0
        %s428 = sadd.f32 %s427, 1e-08
        %v429 = vstv %s428
        %v430 = vrsqrt.pop %v429
        %s431 = vtos %v430
        %v432 = vld [vmem:[%s1] sm:$0xf]
        %v433 = vld [vmem:[%s1 + $0x4] sm:$0xf]
        %v434 = vld [vmem:[%s1 + $0x8] sm:$0xf]
        %v435 = vld [vmem:[%s1 + $0xc] sm:$0xf]
        %v436 = vpack.c.bf16 %v393, %v391
        %v437 = vpack.c.bf16 %v394, %v392
        %v442 = vunpack.c.l.b16 %v432
        %v443 = vunpack.c.l.b16 %v433
        %v444 = vunpack.c.l.b16 %v434
        %v445 = vunpack.c.l.b16 %v435
        %v446 = vpack.c.b16 %v443, %v442
        %v447 = vpack.c.b16 %v445, %v444
        %vm448 = vcmask 130048
        %v450 = vsel %vm448, %v446, 0
        %v453 = vsel %vm448, %v447, 0
        %455 = vmatprep.subr.bf16.mxu0 %v437
        %456 = vmatpush1.bf16.msra.mxu0 %v436
        %457 = vmatprep.subr.bf16.mxu0 0
        %458 = vmatpush1.bf16.msra.mxu0 0
        %459 = vmatprep.subr.bf16.mxu0 0
        %460 = vmatpush1.bf16.msra.mxu0 0
        %461 = vmatprep.subr.bf16.mxu0 0
        %462 = vmatpush1.bf16.msra.mxu0 0
        %463 = vmatprep.subr.bf16.mxu0 0
        %464 = vmatpush1.bf16.msra.mxu0 0
        %465 = vmatprep.subr.bf16.mxu0 0
        %466 = vmatpush1.bf16.msra.mxu0 0
        %467 = vmatprep.subr.bf16.mxu0 0
        %468 = vmatpush1.bf16.msra.mxu0 0
        %469 = vmatprep.subr.bf16.mxu0 0
        %470 = vmatpush1.bf16.msra.mxu0 0
        %471 = vmatprep.subr.bf16.mxu0 0
        %472 = vmatpush1.bf16.msra.mxu0 0
        %473 = vmatprep.subr.bf16.mxu0 0
        %474 = vmatpush1.bf16.msra.mxu0 0
        %475 = vmatprep.subr.bf16.mxu0 0
        %476 = vmatpush1.bf16.msra.mxu0 0
        %477 = vmatprep.subr.bf16.mxu0 0
        %478 = vmatpush1.bf16.msra.mxu0 0
        %479 = vmatprep.subr.bf16.mxu0 0
        %480 = vmatpush1.bf16.msra.mxu0 0
        %481 = vmatprep.subr.bf16.mxu0 0
        %482 = vmatpush1.bf16.msra.mxu0 0
        %483 = vmatprep.subr.bf16.mxu0 0
        %484 = vmatpush1.bf16.msra.mxu0 0
        %485 = vmatprep.subr.bf16.mxu0 0
        %486 = vmatpush1.bf16.msra.mxu0 0
        %487 = vmatprep.mubr.bf16.mxu0 0
        %488 = vmatmul.mubr.bf16.gmra.mrb[0].mxu0 %v450
        %v489 = vpop.f32.mrb[0].mxu0
        %v490 = vadd.f32 0.0, %v489
        %v491 = vpop.f32.mrb[0].mxu0
        %v492 = vadd.f32 0.0, %v491
        %v493 = vpop.f32.mrb[0].mxu0
        %v494 = vadd.f32 0.0, %v493
        %v495 = vpop.f32.mrb[0].mxu0
        %v496 = vadd.f32 0.0, %v495
        %497 = vmatprep.mubr.bf16.mxu0 0
        %498 = vmatmul.mubr.bf16.gmra.mrb[0].mxu0 %v453
        %v499 = vpop.f32.mrb[0].mxu0
        %v500 = vadd.f32 0.0, %v499
        %v501 = vpop.f32.mrb[0].mxu0
        %v502 = vadd.f32 0.0, %v501
        %v503 = vpop.f32.mrb[0].mxu0
        %v504 = vadd.f32 0.0, %v503
        %v505 = vpop.f32.mrb[0].mxu0
        %v506 = vadd.f32 0.0, %v505
        %507 = vdwg.mxu0
        %s508 = ssub.f32 0.0, %s407
        %s509 = smul.f32 %s508, %s431
        %v510 = vld [vmem:[%s2] sm:$0xff]
        %v511 = vld [vmem:[%s2 + $0x8] sm:$0xff]
        %v512 = vld [vmem:[%s2 + $0x10] sm:$0xff]
        %v513 = vld [vmem:[%s2 + $0x18] sm:$0xff]
        %v514 = vstv %s509
        %v515 = vmul.f32 %v514, %v510
        %v516 = vmul.f32 %v514, %v511
        %v517 = vmul.f32 %v514, %v512
        %v518 = vmul.f32 %v514, %v513
        %v519 = vld [vmem:[%s3] sm:$0xff]
        %v520 = vld [vmem:[%s3 + $0x8] sm:$0xff]
        %v521 = vld [vmem:[%s3 + $0x10] sm:$0xff]
        %v522 = vld [vmem:[%s3 + $0x18] sm:$0xff]
        %v523 = vadd.f32 %v515, %v519
        %v524 = vadd.f32 %v516, %v520
        %v525 = vadd.f32 %v517, %v521
        %v526 = vadd.f32 %v518, %v522
        %v527 = vstv %s431
        %v528 = vmul.f32 %v490, %v527
        %v529 = vmul.f32 %v492, %v527
        %v530 = vmul.f32 %v494, %v527
        %v531 = vmul.f32 %v496, %v527
        %v532 = vmul.f32 %v500, %v527
        %v533 = vmul.f32 %v502, %v527
        %v534 = vmul.f32 %v504, %v527
        %v535 = vmul.f32 %v506, %v527
        %537 = vset.pattern.permute.xlu0 0
        %538 = vperm.xlu0 %537, %v523
        %v539 = vpop.permute.xlu0 %538
        %542 = vset.pattern.permute.xlu0 0
        %543 = vperm.xlu0 %542, %v524
        %v544 = vpop.permute.xlu0 %543
        %547 = vset.pattern.permute.xlu0 0
        %548 = vperm.xlu0 %547, %v525
        %v549 = vpop.permute.xlu0 %548
        %552 = vset.pattern.permute.xlu0 0
        %553 = vperm.xlu0 %552, %v526
        %v554 = vpop.permute.xlu0 %553
        %v556 = vadd.f32 %v528, %v539
        %v557 = vadd.f32 %v529, %v539
        %v558 = vadd.f32 %v530, %v544
        %v559 = vadd.f32 %v531, %v544
        %v560 = vadd.f32 %v532, %v549
        %v561 = vadd.f32 %v533, %v549
        %v562 = vadd.f32 %v534, %v554
        %v563 = vadd.f32 %v535, %v554
        %v564 = vmax.f32 %v556, 0.0
        %v565 = vmax.f32 %v557, 0.0
        %v566 = vmax.f32 %v558, 0.0
        %v567 = vmax.f32 %v559, 0.0
        %v568 = vmax.f32 %v560, 0.0
        %v569 = vmax.f32 %v561, 0.0
        %v570 = vmax.f32 %v562, 0.0
        %v571 = vmax.f32 %v563, 0.0
        %v572 = vlaneseq
        %v573 = vand.u32 %v572, 127
        %v574 = vadd.s32 %v573, 128
        %vm575 = vcmp.lt.s32.totalorder %v573, 100
        %vm576 = vcmp.lt.s32.totalorder %v574, 100
        %v577 = vsel %vm575, 1, 0
        %v578 = vsel %vm576, 1, 0
        %vm579 = vcmp.eq.s32.totalorder %v577, 1
        %vm580 = vcmp.eq.s32.totalorder %v578, 1
        %v581 = vsel %vm579, %v564, 0.0
        %v582 = vsel %vm580, %v565, 0.0
        %v583 = vsel %vm579, %v566, 0.0
        %v584 = vsel %vm580, %v567, 0.0
        %v585 = vsel %vm579, %v568, 0.0
        %v586 = vsel %vm580, %v569, 0.0
        %v587 = vsel %vm579, %v570, 0.0
        %v588 = vsel %vm580, %v571, 0.0
        %v589 = vadd.f32 %v581, %v582
        %v590 = vadd.f32 %v589, %v583
        %v591 = vadd.f32 %v590, %v584
        %v592 = vadd.f32 %v591, %v585
        %v593 = vadd.f32 %v592, %v586
        %v594 = vadd.f32 %v593, %v587
        %v595 = vadd.f32 %v594, %v588
        %596 = vadd.xlane.f32.xlu0 %v595
        %v597 = vpop.xlane.xlu0 %596
        %v598 = vrot.slane %v597, 4
        %v599 = vadd.f32 %v597, %v598
        %v600 = vrot.slane %v599, 2
        %v601 = vadd.f32 %v599, %v600
        %v602 = vrot.slane %v601, 1
        %v603 = vadd.f32 %v601, %v602
        %s604 = vtos %v603
        %s605 = smul.f32 %s604, 0.0003125
        %v606 = vmul.f32 %v581, %v581
        %v607 = vmul.f32 %v582, %v582
        %v608 = vmul.f32 %v583, %v583
        %v609 = vmul.f32 %v584, %v584
        %v610 = vmul.f32 %v585, %v585
        %v611 = vmul.f32 %v586, %v586
        %v612 = vmul.f32 %v587, %v587
        %v613 = vmul.f32 %v588, %v588
        %v614 = vadd.f32 %v606, %v607
        %v615 = vadd.f32 %v614, %v608
        %v616 = vadd.f32 %v615, %v609
        %v617 = vadd.f32 %v616, %v610
        %v618 = vadd.f32 %v617, %v611
        %v619 = vadd.f32 %v618, %v612
        %v620 = vadd.f32 %v619, %v613
        %621 = vadd.xlane.f32.xlu0 %v620
        %v622 = vpop.xlane.xlu0 %621
        %v623 = vrot.slane %v622, 4
        %v624 = vadd.f32 %v622, %v623
        %v625 = vrot.slane %v624, 2
        %v626 = vadd.f32 %v624, %v625
        %v627 = vrot.slane %v626, 1
        %v628 = vadd.f32 %v626, %v627
        %s629 = vtos %v628
        %s630 = smul.f32 %s629, 0.0003125
        %s631 = smul.f32 %s605, %s605
        %s632 = ssub.f32 %s630, %s631
        %s633 = smax.f32 %s632, 0.0
        %s634 = sadd.f32 %s633, 1e-08
        %v635 = vstv %s634
        %v636 = vrsqrt.pop %v635
        %s637 = vtos %v636
        %v638 = vld [vmem:[%s4] sm:$0xff]
        %v639 = vld [vmem:[%s4 + $0x8] sm:$0xff]
        %v640 = vld [vmem:[%s4 + $0x10] sm:$0xff]
        %v641 = vld [vmem:[%s4 + $0x18] sm:$0xff]
        %v642 = vstv %s637
        %v643 = vmul.f32 %v638, %v642
        %v644 = vmul.f32 %v639, %v642
        %v645 = vmul.f32 %v640, %v642
        %v646 = vmul.f32 %v641, %v642
        %v647 = vld [vmem:[%s5] sm:$0xff]
        %v648 = vld [vmem:[%s5 + $0x8] sm:$0xff]
        %v649 = vld [vmem:[%s5 + $0x10] sm:$0xff]
        %v650 = vld [vmem:[%s5 + $0x18] sm:$0xff]
        %v651 = vstv %s605
        %v652 = vmul.f32 %v651, %v643
        %v653 = vmul.f32 %v651, %v644
        %v654 = vmul.f32 %v651, %v645
        %v655 = vmul.f32 %v651, %v646
        %v656 = vsub.f32 %v647, %v652
        %v657 = vsub.f32 %v648, %v653
        %v658 = vsub.f32 %v649, %v654
        %v659 = vsub.f32 %v650, %v655
        %661 = vset.pattern.permute.xlu0 0
        %662 = vperm.xlu0 %661, %v643
        %v663 = vpop.permute.xlu0 %662
        %666 = vset.pattern.permute.xlu0 0
        %667 = vperm.xlu0 %666, %v644
        %v668 = vpop.permute.xlu0 %667
        %671 = vset.pattern.permute.xlu0 0
        %672 = vperm.xlu0 %671, %v645
        %v673 = vpop.permute.xlu0 %672
        %676 = vset.pattern.permute.xlu0 0
        %677 = vperm.xlu0 %676, %v646
        %v678 = vpop.permute.xlu0 %677
        %v680 = vmul.f32 %v581, %v663
        %v681 = vmul.f32 %v582, %v663
        %v682 = vmul.f32 %v583, %v668
        %v683 = vmul.f32 %v584, %v668
        %v684 = vmul.f32 %v585, %v673
        %v685 = vmul.f32 %v586, %v673
        %v686 = vmul.f32 %v587, %v678
        %v687 = vmul.f32 %v588, %v678
        %689 = vset.pattern.permute.xlu0 0
        %690 = vperm.xlu0 %689, %v656
        %v691 = vpop.permute.xlu0 %690
        %694 = vset.pattern.permute.xlu0 0
        %695 = vperm.xlu0 %694, %v657
        %v696 = vpop.permute.xlu0 %695
        %699 = vset.pattern.permute.xlu0 0
        %700 = vperm.xlu0 %699, %v658
        %v701 = vpop.permute.xlu0 %700
        %704 = vset.pattern.permute.xlu0 0
        %705 = vperm.xlu0 %704, %v659
        %v706 = vpop.permute.xlu0 %705
        %v708 = vadd.f32 %v680, %v691
        %v709 = vadd.f32 %v681, %v691
        %v710 = vadd.f32 %v682, %v696
        %v711 = vadd.f32 %v683, %v696
        %v712 = vadd.f32 %v684, %v701
        %v713 = vadd.f32 %v685, %v701
        %v714 = vadd.f32 %v686, %v706
        %v715 = vadd.f32 %v687, %v706
        %v716 = vsel %vm579, %v708, 0.0
        %v717 = vsel %vm580, %v709, 0.0
        %v718 = vsel %vm579, %v710, 0.0
        %v719 = vsel %vm580, %v711, 0.0
        %v720 = vsel %vm579, %v712, 0.0
        %v721 = vsel %vm580, %v713, 0.0
        %v722 = vsel %vm579, %v714, 0.0
        %v723 = vsel %vm580, %v715, 0.0
        %724 = vrot.lane.b32.xlu0 %v716, 1
        %v725 = vpop.permute.xlu0 %724
        %726 = vrot.lane.b32.xlu0 %v718, 1
        %v727 = vpop.permute.xlu0 %726
        %728 = vrot.lane.b32.xlu0 %v720, 1
        %v729 = vpop.permute.xlu0 %728
        %730 = vrot.lane.b32.xlu0 %v722, 1
        %v731 = vpop.permute.xlu0 %730
        %732 = vrot.lane.b32.xlu0 %v717, 1
        %v733 = vpop.permute.xlu0 %732
        %734 = vrot.lane.b32.xlu0 %v719, 1
        %v735 = vpop.permute.xlu0 %734
        %736 = vrot.lane.b32.xlu0 %v721, 1
        %v737 = vpop.permute.xlu0 %736
        %738 = vrot.lane.b32.xlu0 %v723, 1
        %v739 = vpop.permute.xlu0 %738
        %vm740 = vcmp.lt.s32.totalorder %v573, 1
        %v741 = vsel %vm740, %v725, %v733
        %v742 = vsel %vm740, %v727, %v735
        %v743 = vsel %vm740, %v729, %v737
        %v744 = vsel %vm740, %v731, %v739
        %v745 = vsel %vm740, %v733, %v725
        %v746 = vsel %vm740, %v735, %v727
        %v747 = vsel %vm740, %v737, %v729
        %v748 = vsel %vm740, %v739, %v731
        %749 = vrot.lane.b32.xlu0 %v716, 127
        %v750 = vpop.permute.xlu0 %749
        %751 = vrot.lane.b32.xlu0 %v718, 127
        %v752 = vpop.permute.xlu0 %751
        %753 = vrot.lane.b32.xlu0 %v720, 127
        %v754 = vpop.permute.xlu0 %753
        %755 = vrot.lane.b32.xlu0 %v722, 127
        %v756 = vpop.permute.xlu0 %755
        %757 = vrot.lane.b32.xlu0 %v717, 127
        %v758 = vpop.permute.xlu0 %757
        %759 = vrot.lane.b32.xlu0 %v719, 127
        %v760 = vpop.permute.xlu0 %759
        %761 = vrot.lane.b32.xlu0 %v721, 127
        %v762 = vpop.permute.xlu0 %761
        %763 = vrot.lane.b32.xlu0 %v723, 127
        %v764 = vpop.permute.xlu0 %763
        %vm765 = vcmp.lt.s32.totalorder %v573, 127
        %v766 = vsel %vm765, %v750, %v758
        %v767 = vsel %vm765, %v752, %v760
        %v768 = vsel %vm765, %v754, %v762
        %v769 = vsel %vm765, %v756, %v764
        %v770 = vsel %vm765, %v758, %v750
        %v771 = vsel %vm765, %v760, %v752
        %v772 = vsel %vm765, %v762, %v754
        %v773 = vsel %vm765, %v764, %v756
        %v774 = vld [vmem:[%s6] sm:$0xff]
        %v775 = vld [vmem:[%s6 + $0x8] sm:$0xff]
        %v776 = vld [vmem:[%s6 + $0x10] sm:$0xff]
        %v777 = vld [vmem:[%s6 + $0x18] sm:$0xff]
        %779 = vset.pattern.permute.xlu0 0
        %780 = vperm.xlu0 %779, %v774
        %v781 = vpop.permute.xlu0 %780
        %784 = vset.pattern.permute.xlu0 0
        %785 = vperm.xlu0 %784, %v775
        %v786 = vpop.permute.xlu0 %785
        %789 = vset.pattern.permute.xlu0 0
        %790 = vperm.xlu0 %789, %v776
        %v791 = vpop.permute.xlu0 %790
        %794 = vset.pattern.permute.xlu0 0
        %795 = vperm.xlu0 %794, %v777
        %v796 = vpop.permute.xlu0 %795
        %v798 = vmul.f32 %v781, %v745
        %v799 = vmul.f32 %v781, %v741
        %v800 = vmul.f32 %v786, %v746
        %v801 = vmul.f32 %v786, %v742
        %v802 = vmul.f32 %v791, %v747
        %v803 = vmul.f32 %v791, %v743
        %v804 = vmul.f32 %v796, %v748
        %v805 = vmul.f32 %v796, %v744
        %806 = vset.pattern.permute.xlu0 1
        %807 = vperm.xlu0 %806, %v774
        %v808 = vpop.permute.xlu0 %807
        %810 = vset.pattern.permute.xlu0 1
        %811 = vperm.xlu0 %810, %v775
        %v812 = vpop.permute.xlu0 %811
        %814 = vset.pattern.permute.xlu0 1
        %815 = vperm.xlu0 %814, %v776
        %v816 = vpop.permute.xlu0 %815
        %818 = vset.pattern.permute.xlu0 1
        %819 = vperm.xlu0 %818, %v777
        %v820 = vpop.permute.xlu0 %819
        %v822 = vmul.f32 %v808, %v716
        %v823 = vmul.f32 %v808, %v717
        %v824 = vmul.f32 %v812, %v718
        %v825 = vmul.f32 %v812, %v719
        %v826 = vmul.f32 %v816, %v720
        %v827 = vmul.f32 %v816, %v721
        %v828 = vmul.f32 %v820, %v722
        %v829 = vmul.f32 %v820, %v723
        %v830 = vadd.f32 %v798, %v822
        %v831 = vadd.f32 %v799, %v823
        %v832 = vadd.f32 %v800, %v824
        %v833 = vadd.f32 %v801, %v825
        %v834 = vadd.f32 %v802, %v826
        %v835 = vadd.f32 %v803, %v827
        %v836 = vadd.f32 %v804, %v828
        %v837 = vadd.f32 %v805, %v829
        %838 = vset.pattern.permute.xlu0 2
        %839 = vperm.xlu0 %838, %v774
        %v840 = vpop.permute.xlu0 %839
        %842 = vset.pattern.permute.xlu0 2
        %843 = vperm.xlu0 %842, %v775
        %v844 = vpop.permute.xlu0 %843
        %846 = vset.pattern.permute.xlu0 2
        %847 = vperm.xlu0 %846, %v776
        %v848 = vpop.permute.xlu0 %847
        %850 = vset.pattern.permute.xlu0 2
        %851 = vperm.xlu0 %850, %v777
        %v852 = vpop.permute.xlu0 %851
        %v854 = vmul.f32 %v840, %v766
        %v855 = vmul.f32 %v840, %v770
        %v856 = vmul.f32 %v844, %v767
        %v857 = vmul.f32 %v844, %v771
        %v858 = vmul.f32 %v848, %v768
        %v859 = vmul.f32 %v848, %v772
        %v860 = vmul.f32 %v852, %v769
        %v861 = vmul.f32 %v852, %v773
        %v862 = vadd.f32 %v830, %v854
        %v863 = vadd.f32 %v831, %v855
        %v864 = vadd.f32 %v832, %v856
        %v865 = vadd.f32 %v833, %v857
        %v866 = vadd.f32 %v834, %v858
        %v867 = vadd.f32 %v835, %v859
        %v868 = vadd.f32 %v836, %v860
        %v869 = vadd.f32 %v837, %v861
        %s870 = sld [smem:[#allocation2]]
        %vm871 = vcmp.gt.f32.partialorder %v862, 0.0
        %vm872 = vcmp.gt.f32.partialorder %v863, 0.0
        %vm873 = vcmp.gt.f32.partialorder %v864, 0.0
        %vm874 = vcmp.gt.f32.partialorder %v865, 0.0
        %vm875 = vcmp.gt.f32.partialorder %v866, 0.0
        %vm876 = vcmp.gt.f32.partialorder %v867, 0.0
        %vm877 = vcmp.gt.f32.partialorder %v868, 0.0
        %vm878 = vcmp.gt.f32.partialorder %v869, 0.0
        %v879 = vstv %s870
        %v880 = vmul.f32 %v879, %v862
        %v881 = vmul.f32 %v879, %v863
        %v882 = vmul.f32 %v879, %v864
        %v883 = vmul.f32 %v879, %v865
        %v884 = vmul.f32 %v879, %v866
        %v885 = vmul.f32 %v879, %v867
        %v886 = vmul.f32 %v879, %v868
        %v887 = vmul.f32 %v879, %v869
        %v888 = vsel %vm871, %v862, %v880
        %v889 = vsel %vm872, %v863, %v881
        %v890 = vsel %vm873, %v864, %v882
        %v891 = vsel %vm874, %v865, %v883
        %v892 = vsel %vm875, %v866, %v884
        %v893 = vsel %vm876, %v867, %v885
        %v894 = vsel %vm877, %v868, %v886
        %v895 = vsel %vm878, %v869, %v887
        %v896 = vsel %vm579, %v888, 0.0
        %v897 = vsel %vm580, %v889, 0.0
        %v898 = vsel %vm579, %v890, 0.0
        %v899 = vsel %vm580, %v891, 0.0
        %v900 = vsel %vm579, %v892, 0.0
        %v901 = vsel %vm580, %v893, 0.0
        %v902 = vsel %vm579, %v894, 0.0
        %v903 = vsel %vm580, %v895, 0.0
        %v904 = vadd.f32 %v896, %v897
        %v905 = vadd.f32 %v904, %v898
        %v906 = vadd.f32 %v905, %v899
        %v907 = vadd.f32 %v906, %v900
        %v908 = vadd.f32 %v907, %v901
        %v909 = vadd.f32 %v908, %v902
        %v910 = vadd.f32 %v909, %v903
        %911 = vadd.xlane.f32.xlu0 %v910
        %v912 = vpop.xlane.xlu0 %911
        %v913 = vrot.slane %v912, 4
        %v914 = vadd.f32 %v912, %v913
        %v915 = vrot.slane %v914, 2
        %v916 = vadd.f32 %v914, %v915
        %v917 = vrot.slane %v916, 1
        %v918 = vadd.f32 %v916, %v917
        %s919 = vtos %v918
        %s920 = smul.f32 %s919, 0.0003125
        %v921 = vmul.f32 %v896, %v896
        %v922 = vmul.f32 %v897, %v897
        %v923 = vmul.f32 %v898, %v898
        %v924 = vmul.f32 %v899, %v899
        %v925 = vmul.f32 %v900, %v900
        %v926 = vmul.f32 %v901, %v901
        %v927 = vmul.f32 %v902, %v902
        %v928 = vmul.f32 %v903, %v903
        %v929 = vadd.f32 %v921, %v922
        %v930 = vadd.f32 %v929, %v923
        %v931 = vadd.f32 %v930, %v924
        %v932 = vadd.f32 %v931, %v925
        %v933 = vadd.f32 %v932, %v926
        %v934 = vadd.f32 %v933, %v927
        %v935 = vadd.f32 %v934, %v928
        %936 = vadd.xlane.f32.xlu0 %v935
        %v937 = vpop.xlane.xlu0 %936
        %v938 = vrot.slane %v937, 4
        %v939 = vadd.f32 %v937, %v938
        %v940 = vrot.slane %v939, 2
        %v941 = vadd.f32 %v939, %v940
        %v942 = vrot.slane %v941, 1
        %v943 = vadd.f32 %v941, %v942
        %s944 = vtos %v943
        %s945 = smul.f32 %s944, 0.0003125
        %s946 = smul.f32 %s920, %s920
        %s947 = ssub.f32 %s945, %s946
        %s948 = smax.f32 %s947, 0.0
        %s949 = sadd.f32 %s948, 1e-08
        %v950 = vstv %s949
        %v951 = vrsqrt.pop %v950
        %s952 = vtos %v951
        %v953 = vld [vmem:[%s8] sm:$0xf]
        %v954 = vld [vmem:[%s8 + $0x4] sm:$0xf]
        %v955 = vpack.c.bf16 %v898, %v896
        %v956 = vpack.c.bf16 %v899, %v897
        %v957 = vpack.c.bf16 %v902, %v900
        %v958 = vpack.c.bf16 %v903, %v901
        %v961 = vunpack.c.l.b16 %v953
        %v962 = vunpack.c.l.b16 %v954
        %v963 = vpack.c.b16 %v962, %v961
        %vm964 = vcmask 261120
        %v966 = vsel %vm964, %v963, 0
        %968 = vmatprep.subr.bf16.mxu0 %v956
        %969 = vmatpush1.bf16.msra.mxu0 %v955
        %970 = vmatprep.subr.bf16.mxu0 %v958
        %971 = vmatpush1.bf16.msra.mxu0 %v957
        %972 = vmatprep.subr.bf16.mxu0 0
        %973 = vmatpush1.bf16.msra.mxu0 0
        %974 = vmatprep.subr.bf16.mxu0 0
        %975 = vmatpush1.bf16.msra.mxu0 0
        %976 = vmatprep.subr.bf16.mxu0 0
        %977 = vmatpush1.bf16.msra.mxu0 0
        %978 = vmatprep.subr.bf16.mxu0 0
        %979 = vmatpush1.bf16.msra.mxu0 0
        %980 = vmatprep.subr.bf16.mxu0 0
        %981 = vmatpush1.bf16.msra.mxu0 0
        %982 = vmatprep.subr.bf16.mxu0 0
        %983 = vmatpush1.bf16.msra.mxu0 0
        %984 = vmatprep.subr.bf16.mxu0 0
        %985 = vmatpush1.bf16.msra.mxu0 0
        %986 = vmatprep.subr.bf16.mxu0 0
        %987 = vmatpush1.bf16.msra.mxu0 0
        %988 = vmatprep.subr.bf16.mxu0 0
        %989 = vmatpush1.bf16.msra.mxu0 0
        %990 = vmatprep.subr.bf16.mxu0 0
        %991 = vmatpush1.bf16.msra.mxu0 0
        %992 = vmatprep.subr.bf16.mxu0 0
        %993 = vmatpush1.bf16.msra.mxu0 0
        %994 = vmatprep.subr.bf16.mxu0 0
        %995 = vmatpush1.bf16.msra.mxu0 0
        %996 = vmatprep.subr.bf16.mxu0 0
        %997 = vmatpush1.bf16.msra.mxu0 0
        %998 = vmatprep.subr.bf16.mxu0 0
        %999 = vmatpush1.bf16.msra.mxu0 0
        %1000 = vmatprep.mubr.bf16.mxu0 0
        %1001 = vmatmul.mubr.bf16.gmra.mrb[0].mxu0 %v966
        %v1002 = vpop.f32.mrb[0].mxu0
        %v1003 = vadd.f32 0.0, %v1002
        %v1004 = vpop.f32.mrb[0].mxu0
        %v1005 = vadd.f32 0.0, %v1004
        %v1006 = vpop.f32.mrb[0].mxu0
        %v1007 = vadd.f32 0.0, %v1006
        %v1008 = vpop.f32.mrb[0].mxu0
        %v1009 = vadd.f32 0.0, %v1008
        %1010 = vdwg.mxu0
        %s1011 = ssub.f32 0.0, %s920
        %s1012 = smul.f32 %s1011, %s952
        %v1013 = vld [vmem:[%s9] sm:$0xff]
        %v1014 = vld [vmem:[%s9 + $0x8] sm:$0xff]
        %v1015 = vstv %s1012
        %v1016 = vmul.f32 %v1015, %v1013
        %v1017 = vmul.f32 %v1015, %v1014
        %v1018 = vld [vmem:[%s10] sm:$0xff]
        %v1019 = vld [vmem:[%s10 + $0x8] sm:$0xff]
        %v1020 = vadd.f32 %v1016, %v1018
        %v1021 = vadd.f32 %v1017, %v1019
        %v1022 = vstv %s952
        %v1023 = vmul.f32 %v1003, %v1022
        %v1024 = vmul.f32 %v1005, %v1022
        %v1025 = vmul.f32 %v1007, %v1022
        %v1026 = vmul.f32 %v1009, %v1022
        %1028 = vset.pattern.permute.xlu0 0
        %1029 = vperm.xlu0 %1028, %v1020
        %v1030 = vpop.permute.xlu0 %1029
        %1033 = vset.pattern.permute.xlu0 0
        %1034 = vperm.xlu0 %1033, %v1021
        %v1035 = vpop.permute.xlu0 %1034
        %v1037 = vadd.f32 %v1030, %v387
        %v1038 = vadd.f32 %v1030, %v388
        %v1039 = vadd.f32 %v1035, %v389
        %v1040 = vadd.f32 %v1035, %v390
        %v1041 = vadd.f32 %v1023, %v1037
        %v1042 = vadd.f32 %v1024, %v1038
        %v1043 = vadd.f32 %v1025, %v1039
        %v1044 = vadd.f32 %v1026, %v1040
        %1045 = vst [vmem:[%s380] sm:$0xff] %v1041
        %1046 = vst [vmem:[%s380 + $0x8] sm:$0xff] %v1042
        %1047 = vst [vmem:[%s380 + $0x10] sm:$0xff] %v1043
        %1048 = vst [vmem:[%s380 + $0x18] sm:$0xff] %v1044
        %s1049 = sand.u32 %s270, 1
        %s1050 = scalar_lea.sflag [#allocation4], %s1049
        %s1051 = sand.u32 %s270, 1
        %s1052 = smul.addr %s1051, 32
        %s1053 = scalar_lea.vmem [#allocation3], %s1052
        // Predicated region
        $region65: #{tpu_custom_call.1} parent=63 // pred_check
          %p1054 = pneg %p280
        $region66: #{tpu_custom_call.1} parent=63 // pred_check_branch
          %1056 = sbr.rel (%p1054) target = $region68
        $region67: #{tpu_custom_call.1} parent=63 // pred_region
          %s1058 = ssub.s32 512, 512
          %1059 = vsyncadd %s1050, %s1058
          %s1060 = smul.addr %s26, 4
          %s1061 = smul.addr %s1060, 128
          %s1062 = scalar_lea.hbm %s11, %s1061
          %s1063 = sshll.u32 %s1053, 4
          %s1064 = int_to_ptr.vmem [resolvable:$true] %s1063
          %1069 = dma.vmem_to_hbm [thread:$0]  %s1064, 512, %s1062, %s1050, 256, 256, 16
        $region68: #{tpu_custom_call.1} parent=63 // pred_fallthru
          _
      $region64: #{tpu_custom_call.1} parent=5 // pred_fallthru
        _
      %p1070 = scmp.le.s32.totalorder 2, %s21
      // Predicated region
      $region69: #{tpu_custom_call.1} parent=5 // pred_check
        %p1071 = pneg %p1070
      $region70: #{tpu_custom_call.1} parent=5 // pred_check_branch
        %1073 = sbr.rel (%p1071) target = $region72
      $region71: #{tpu_custom_call.1} parent=5 // pred_region
        %s1074 = ssub.s32 %s21, 2
        // Predicated region
        $region73: #{tpu_custom_call.1} parent=71 // pred_check
          %p1075 = pneg %p286
        $region74: #{tpu_custom_call.1} parent=71 // pred_check_branch
          %1077 = sbr.rel (%p1075) target = $region76
        $region75: #{tpu_custom_call.1} parent=71 // pred_region
          %s1078 = sand.u32 %s271, 1
          %s1079 = scalar_lea.sflag [#allocation4], %s1078
          %s1080 = sand.u32 %s271, 1
          %s1081 = smul.addr %s1080, 32
          %s1082 = scalar_lea.vmem [#allocation3], %s1081
          %1083 = dma.done %s1079, 512
        $region76: #{tpu_custom_call.1} parent=71 // pred_fallthru
          _
      $region72: #{tpu_custom_call.1} parent=5 // pred_fallthru
        _
    $region6: #{tpu_custom_call.1} parent=1 // loop_footer
      %s25 = sadd.s32 1, %s21
    $region7: #{tpu_custom_call.1} parent=1 // loop_footer_branch
      %20 = sbr.rel target = $region3
    $region8: #{tpu_custom_call.1} parent=1 // loop_exit
      _
    %1084 = vsyncpa [#allocation4], 1
    %s1085 = scalar_lea.sflag [#allocation4], 1
    %1086 = vsyncpa %s1085, 1

</llo_original>
